<compile_context>
chip_gen: v6e
topology: v6e:2x2x1
jax: 0.10.0
libtpu: 0.0.40
codegen_flags: <defaults>
</compile_context>

<pallas_src>
import functools

import jax
import jax.numpy as jnp
from jax.experimental import pallas as pl
from jax.experimental.pallas import tpu as pltpu


def _r8(n):
    return ((n + 7) // 8) * 8


def _cdiv(a, b):
    return (a + b - 1) // b


_LANES = 128  # lane-dense packing / output width


def pack_params(params):
    """Pack all model parameters into ONE (rows, 128) f32 buffer (call once).

    The BERT-stand-in classifier and fc_txt are folded into a single matrix
    M = emb @ w_cls @ wt and bias c = b_cls @ wt + bt (exact up to f32
    associativity).  Every sub-array starts at an 8-row-aligned offset so
    in-kernel slices are sublane-aligned; w2 / b2 are zero-padded to 128
    output columns so the kernel's final store is a full unmasked lane-dense
    [TM, 128] slab.
    """
    emb = params["emb"].astype(jnp.float32)        # (V, D)
    w_cls = params["w_cls"].astype(jnp.float32)    # (D, 3)
    b_cls = params["b_cls"].astype(jnp.float32)    # (3,)
    wt = params["wt"].astype(jnp.float32)          # (3, H2)
    bt = params["bt"].astype(jnp.float32)          # (H2,)
    w1 = params["w1"].astype(jnp.float32)          # (H2, H)
    b1 = params["b1"].astype(jnp.float32)          # (H,)
    w2 = params["w2"].astype(jnp.float32)          # (H, NL)
    b2 = params["b2"].astype(jnp.float32)          # (NL,)

    V, _D = emb.shape
    H2, H = w1.shape
    NL = w2.shape[1]
    assert max(H2, H, NL) <= _LANES, "feature dims must fit in 128 lanes"

    # Fold: pooled@w_cls@wt == counts @ (emb@w_cls@wt) / S ; bias folds too.
    M = (emb @ w_cls) @ wt                          # (V, H2), S-independent
    c = b_cls @ wt + bt                             # (H2,)

    off_M = 0
    off_w1 = off_M + _r8(V)
    off_w2 = off_w1 + _r8(H2)
    off_b = off_w2 + _r8(H)                         # 3 bias rows, padded to 8
    rows = off_b + 8

    p = jnp.zeros((rows, _LANES), jnp.float32)
    p = p.at[off_M:off_M + V, :H2].set(M)
    p = p.at[off_w1:off_w1 + H2, :H].set(w1)
    p = p.at[off_w2:off_w2 + H, :NL].set(w2)
    p = p.at[off_b + 0, :H2].set(c)                 # folded fc_txt bias
    p = p.at[off_b + 1, :H].set(b1)
    p = p.at[off_b + 2, :NL].set(b2)

    meta = dict(V=V, H2=H2, H=H, NL=NL,
                off_M=off_M, off_w1=off_w1, off_w2=off_w2, off_b=off_b)
    return p, meta


def _fused_model_kernel(texts_ref, p_ref, o_ref, *, S, V, H2, H, NL,
                        off_M, off_w1, off_w2, off_b):
    del NL  # w2 / b2 are pre-padded to 128 lanes; output is full-width.
    TM = texts_ref.shape[0]
    tok = texts_ref[...]                                     # (TM, S) int32

    # ---- one-hot token counts (int32 accumulation, single f32 convert) -----
    lane_ids = jax.lax.broadcasted_iota(jnp.int32, (TM, V), 1)
    counts = jnp.zeros((TM, V), jnp.int32)
    if S <= 16:                                              # static unroll
        for s in range(S):
            counts = counts + (tok[:, s:s + 1] == lane_ids).astype(jnp.int32)
    else:                                                    # bounded live ranges
        def body(s, c):
            col = jax.lax.dynamic_slice_in_dim(tok, s, 1, axis=1)
            return c + (col == lane_ids).astype(jnp.int32)
        counts = jax.lax.fori_loop(0, S, body, counts, unroll=True)
    counts_f = counts.astype(jnp.float32)                    # (TM, V)

    bias_blk = p_ref[off_b:off_b + 8, :]                     # (8, 128)

    # ---- folded (mean-pool -> classifier -> fc_txt) + ReLU ------------------
    M = p_ref[off_M:off_M + V, 0:H2]                         # (V, H2)
    h = (jnp.dot(counts_f, M, preferred_element_type=jnp.float32) * (1.0 / S)
         + bias_blk[0:1, 0:H2])
    h = jnp.maximum(h, 0.0)                                  # (TM, H2)

    # ---- fc1 + ReLU ---------------------------------------------------------
    w1 = p_ref[off_w1:off_w1 + H2, 0:H]                      # (H2, H)
    h = jnp.maximum(jnp.dot(h, w1, preferred_element_type=jnp.float32)
                    + bias_blk[1:2, 0:H], 0.0)               # (TM, H)

    # ---- fc2: lane-dense 128-wide output (cols >= num_labels are zero) ------
    w2 = p_ref[off_w2:off_w2 + H, :]                         # (H, 128)
    o_ref[...] = (jnp.dot(h, w2, preferred_element_type=jnp.float32)
                  + bias_blk[2:3, :])


def forward(texts, packed, meta):
    """Fused Pallas forward pass.

    texts : (B, S) int32 token ids.
    packed, meta : from pack_params(params)  (computed once, outside).
    """
    NL = meta["NL"]
    B, S = texts.shape

    # Batch tiling: TM rows per grid step (multiple of 8, <= 512); guarantee
    # >= 2 grid steps so ("parallel",) can shard the batch across both
    # TensorCores on v7x.
    B_pad = _r8(B)
    TM_CAP = 512
    steps = max(2, _cdiv(B_pad, TM_CAP))
    TM = _r8(_cdiv(B_pad, steps))
    B_pad = steps * TM
    if B_pad != B:
        texts = jnp.pad(texts, ((0, B_pad - B), (0, 0)))

    kernel = functools.partial(_fused_model_kernel, S=S, **meta)

    flops = 2 * B_pad * (meta["V"] * meta["H2"]
                         + meta["H2"] * meta["H"]
                         + meta["H"] * _LANES)
    bytes_accessed = B_pad * (S * 4 + _LANES * 4) + int(packed.size) * 4
    cost = pl.CostEstimate(flops=flops, transcendentals=0,
                           bytes_accessed=bytes_accessed)

    out = pl.pallas_call(
        kernel,
        out_shape=jax.ShapeDtypeStruct((B_pad, _LANES), jnp.float32),
        grid=(steps,),
        in_specs=[
            pl.BlockSpec((TM, S), lambda i: (i, 0)),           # token ids
            pl.BlockSpec(packed.shape, lambda i: (0, 0)),      # packed params
        ],
        out_specs=pl.BlockSpec((TM, _LANES), lambda i: (i, 0)),
        compiler_params=pltpu.CompilerParams(
            dimension_semantics=("parallel",)),
        cost_estimate=cost,
    )(texts, packed)

    return out[:B, :NL]


def init_params(key, hidden_dim=32, num_labels=3, bert_vocab=64, bert_dim=8):
    """Deterministic synthetic parameters (shapes as in module __init__)."""
    ks = jax.random.split(key, 9)
    h2 = hidden_dim // 2
    return {
        # BERT stand-in
        "emb":   jax.random.normal(ks[0], (bert_vocab, bert_dim), jnp.float32) * 0.1,
        "w_cls": jax.random.normal(ks[1], (bert_dim, 3), jnp.float32) * 0.1,
        "b_cls": jax.random.normal(ks[2], (3,), jnp.float32) * 0.1,
        # head (weights stored (in, out), i.e. transposed vs. PyTorch)
        "wt":    jax.random.normal(ks[3], (3, h2), jnp.float32) * 0.1,
        "bt":    jax.random.normal(ks[4], (h2,), jnp.float32) * 0.1,
        "w1":    jax.random.normal(ks[5], (h2, hidden_dim), jnp.float32) * 0.1,
        "b1":    jax.random.normal(ks[6], (hidden_dim,), jnp.float32) * 0.1,
        "w2":    jax.random.normal(ks[7], (hidden_dim, num_labels), jnp.float32) * 0.1,
        "b2":    jax.random.normal(ks[8], (num_labels,), jnp.float32) * 0.1,
    }


def forward_ref(texts, params):
    """Pure-JAX reference (gather + mean pool BERT stand-in, then the head)."""
    emb = params["emb"][texts]                      # (B, S, D)
    pooled = emb.mean(axis=1)                       # (B, D)
    x = pooled @ params["w_cls"] + params["b_cls"]  # (B, 3)  bert logits
    h = jnp.maximum(x @ params["wt"] + params["bt"], 0.0)
    h = jnp.maximum(h @ params["w1"] + params["b1"], 0.0)
    return h @ params["w2"] + params["b2"]


if __name__ == "__main__":
    key = jax.random.PRNGKey(0)
    k_tok, k_par = jax.random.split(key)

    B, S = 8, 8
    hidden_dim, num_labels, vocab, bert_dim = 32, 3, 64, 8

    texts = jax.random.randint(k_tok, (B, S), 0, vocab, dtype=jnp.int32)
    params = init_params(k_par, hidden_dim=hidden_dim, num_labels=num_labels,
                         bert_vocab=vocab, bert_dim=bert_dim)

    # Pack once (hoisted out of the per-call path).
    packed, meta = pack_params(params)
    packed = jax.block_until_ready(packed)

    out = forward(texts, packed, meta)
    out = jax.block_until_ready(out)

    ref = forward_ref(texts, params)
    assert out.shape == (B, num_labels), out.shape
    max_err = float(jnp.max(jnp.abs(out - ref)))
    assert jnp.allclose(out, ref, atol=1e-3, rtol=1e-3), (
        f"mismatch vs reference, max abs err = {max_err}")

    print("KERNEL_OK")
</pallas_src>

<mosaic_0001>
module attributes {stable_mosaic.version = 11 : i64} {
  func.func @_fused_model_kernel(%arg0: i32, %arg1: memref<8x8xi32, #tpu.memory_space<vmem>>, %arg2: memref<120x128xf32, #tpu.memory_space<vmem>>, %arg3: memref<8x128xf32, #tpu.memory_space<vmem>>) attributes {dimension_semantics = [#tpu.dimension_semantics<parallel>], iteration_bounds = array<i64: 2>, scalar_prefetch = 0 : i64, scratch_operands = 0 : i64, tpu.core_type = #tpu.core_type<tc>, window_params = [{transform_indices = @transform_0, window_bounds = array<i64: 8, 8>}, {pipeline_mode = #tpu.pipeline_mode<synchronous>, transform_indices = @transform_1, window_bounds = array<i64: 120, 128>}, {transform_indices = @transform_2, window_bounds = array<i64: 8, 128>}]} {
    %c0 = arith.constant 0 : index
    %c0_0 = arith.constant 0 : index
    %0 = vector.load %arg1[%c0, %c0_0] : memref<8x8xi32, #tpu.memory_space<vmem>>, vector<8x8xi32>
    %1 = tpu.iota {dimensions = array<i32: 1>} : vector<8x64xi32>
    %c0_i32 = arith.constant 0 : i32
    %2 = vector.broadcast %c0_i32 : i32 to vector<8x64xi32>
    %3 = vector.extract_strided_slice %0 {offsets = [0, 0], sizes = [8, 1], strides = [1, 1]} : vector<8x8xi32> to vector<8x1xi32>
    %4 = vector.broadcast %3 : vector<8x1xi32> to vector<8x64xi32>
    %5 = arith.cmpi eq, %4, %1 : vector<8x64xi32>
    %6 = arith.extui %5 : vector<8x64xi1> to vector<8x64xi32>
    %7 = arith.addi %2, %6 : vector<8x64xi32>
    %8 = vector.extract_strided_slice %0 {offsets = [0, 1], sizes = [8, 1], strides = [1, 1]} : vector<8x8xi32> to vector<8x1xi32>
    %9 = vector.broadcast %8 : vector<8x1xi32> to vector<8x64xi32>
    %10 = arith.cmpi eq, %9, %1 : vector<8x64xi32>
    %11 = arith.extui %10 : vector<8x64xi1> to vector<8x64xi32>
    %12 = arith.addi %7, %11 : vector<8x64xi32>
    %13 = vector.extract_strided_slice %0 {offsets = [0, 2], sizes = [8, 1], strides = [1, 1]} : vector<8x8xi32> to vector<8x1xi32>
    %14 = vector.broadcast %13 : vector<8x1xi32> to vector<8x64xi32>
    %15 = arith.cmpi eq, %14, %1 : vector<8x64xi32>
    %16 = arith.extui %15 : vector<8x64xi1> to vector<8x64xi32>
    %17 = arith.addi %12, %16 : vector<8x64xi32>
    %18 = vector.extract_strided_slice %0 {offsets = [0, 3], sizes = [8, 1], strides = [1, 1]} : vector<8x8xi32> to vector<8x1xi32>
    %19 = vector.broadcast %18 : vector<8x1xi32> to vector<8x64xi32>
    %20 = arith.cmpi eq, %19, %1 : vector<8x64xi32>
    %21 = arith.extui %20 : vector<8x64xi1> to vector<8x64xi32>
    %22 = arith.addi %17, %21 : vector<8x64xi32>
    %23 = vector.extract_strided_slice %0 {offsets = [0, 4], sizes = [8, 1], strides = [1, 1]} : vector<8x8xi32> to vector<8x1xi32>
    %24 = vector.broadcast %23 : vector<8x1xi32> to vector<8x64xi32>
    %25 = arith.cmpi eq, %24, %1 : vector<8x64xi32>
    %26 = arith.extui %25 : vector<8x64xi1> to vector<8x64xi32>
    %27 = arith.addi %22, %26 : vector<8x64xi32>
    %28 = vector.extract_strided_slice %0 {offsets = [0, 5], sizes = [8, 1], strides = [1, 1]} : vector<8x8xi32> to vector<8x1xi32>
    %29 = vector.broadcast %28 : vector<8x1xi32> to vector<8x64xi32>
    %30 = arith.cmpi eq, %29, %1 : vector<8x64xi32>
    %31 = arith.extui %30 : vector<8x64xi1> to vector<8x64xi32>
    %32 = arith.addi %27, %31 : vector<8x64xi32>
    %33 = vector.extract_strided_slice %0 {offsets = [0, 6], sizes = [8, 1], strides = [1, 1]} : vector<8x8xi32> to vector<8x1xi32>
    %34 = vector.broadcast %33 : vector<8x1xi32> to vector<8x64xi32>
    %35 = arith.cmpi eq, %34, %1 : vector<8x64xi32>
    %36 = arith.extui %35 : vector<8x64xi1> to vector<8x64xi32>
    %37 = arith.addi %32, %36 : vector<8x64xi32>
    %38 = vector.extract_strided_slice %0 {offsets = [0, 7], sizes = [8, 1], strides = [1, 1]} : vector<8x8xi32> to vector<8x1xi32>
    %39 = vector.broadcast %38 : vector<8x1xi32> to vector<8x64xi32>
    %40 = arith.cmpi eq, %39, %1 : vector<8x64xi32>
    %41 = arith.extui %40 : vector<8x64xi1> to vector<8x64xi32>
    %42 = arith.addi %37, %41 : vector<8x64xi32>
    %43 = arith.sitofp %42 : vector<8x64xi32> to vector<8x64xf32>
    %c112 = arith.constant 112 : index
    %c0_1 = arith.constant 0 : index
    %44 = vector.load %arg2[%c112, %c0_1] : memref<120x128xf32, #tpu.memory_space<vmem>>, vector<8x128xf32>
    %c0_2 = arith.constant 0 : index
    %c0_3 = arith.constant 0 : index
    %45 = vector.load %arg2[%c0_2, %c0_3] : memref<120x128xf32, #tpu.memory_space<vmem>>, vector<64x16xf32>
    %cst = arith.constant dense<0.000000e+00> : vector<8x16xf32>
    %46 = tpu.matmul %43, %45, %cst {dimension_numbers = #tpu.dot_dimension_numbers<[1], [0], [0], [1], [0, 0, 1, 1], [], []>} : vector<8x64xf32>, vector<64x16xf32>, vector<8x16xf32> -> vector<8x16xf32>
    %cst_4 = arith.constant 1.250000e-01 : f32
    %47 = vector.broadcast %cst_4 : f32 to vector<8x16xf32>
    %48 = arith.mulf %46, %47 : vector<8x16xf32>
    %49 = vector.extract_strided_slice %44 {offsets = [0, 0], sizes = [1, 16], strides = [1, 1]} : vector<8x128xf32> to vector<1x16xf32>
    %50 = vector.broadcast %49 : vector<1x16xf32> to vector<8x16xf32>
    %51 = arith.addf %48, %50 : vector<8x16xf32>
    %cst_5 = arith.constant 0.000000e+00 : f32
    %52 = vector.broadcast %cst_5 : f32 to vector<8x16xf32>
    %53 = arith.maximumf %51, %52 : vector<8x16xf32>
    %c64 = arith.constant 64 : index
    %c0_6 = arith.constant 0 : index
    %54 = vector.load %arg2[%c64, %c0_6] : memref<120x128xf32, #tpu.memory_space<vmem>>, vector<16x32xf32>
    %cst_7 = arith.constant dense<0.000000e+00> : vector<8x32xf32>
    %55 = tpu.matmul %53, %54, %cst_7 {dimension_numbers = #tpu.dot_dimension_numbers<[1], [0], [0], [1], [0, 0, 1, 1], [], []>} : vector<8x16xf32>, vector<16x32xf32>, vector<8x32xf32> -> vector<8x32xf32>
    %56 = vector.extract_strided_slice %44 {offsets = [1, 0], sizes = [1, 32], strides = [1, 1]} : vector<8x128xf32> to vector<1x32xf32>
    %57 = vector.broadcast %56 : vector<1x32xf32> to vector<8x32xf32>
    %58 = arith.addf %55, %57 : vector<8x32xf32>
    %cst_8 = arith.constant 0.000000e+00 : f32
    %59 = vector.broadcast %cst_8 : f32 to vector<8x32xf32>
    %60 = arith.maximumf %58, %59 : vector<8x32xf32>
    %c80 = arith.constant 80 : index
    %c0_9 = arith.constant 0 : index
    %61 = vector.load %arg2[%c80, %c0_9] : memref<120x128xf32, #tpu.memory_space<vmem>>, vector<32x128xf32>
    %cst_10 = arith.constant dense<0.000000e+00> : vector<8x128xf32>
    %62 = tpu.matmul %60, %61, %cst_10 {dimension_numbers = #tpu.dot_dimension_numbers<[1], [0], [0], [1], [0, 0, 1, 1], [], []>} : vector<8x32xf32>, vector<32x128xf32>, vector<8x128xf32> -> vector<8x128xf32>
    %63 = vector.extract_strided_slice %44 {offsets = [2, 0], sizes = [1, 128], strides = [1, 1]} : vector<8x128xf32> to vector<1x128xf32>
    %64 = vector.broadcast %63 : vector<1x128xf32> to vector<8x128xf32>
    %65 = arith.addf %62, %64 : vector<8x128xf32>
    %c0_11 = arith.constant 0 : index
    %c0_12 = arith.constant 0 : index
    %66 = vector.load %arg3[%c0_11, %c0_12] : memref<8x128xf32, #tpu.memory_space<vmem>>, vector<8x128xf32>
    tpu.vector_store %arg3[%c0_11, %c0_12], %65 {strides = array<i32>} : memref<8x128xf32, #tpu.memory_space<vmem>>, vector<8x128xf32>,
    return
  }
  func.func @transform_0(%arg0: i32) -> (i32, i32) {
    %c0_i32 = arith.constant 0 : i32
    %c0_i32_0 = arith.constant 0 : i32
    return %arg0, %c0_i32 : i32, i32
  }
  func.func @transform_1(%arg0: i32) -> (i32, i32) {
    %c0_i32 = arith.constant 0 : i32
    %c0_i32_0 = arith.constant 0 : i32
    %c0_i32_1 = arith.constant 0 : i32
    return %c0_i32, %c0_i32_0 : i32, i32
  }
  func.func @transform_2(%arg0: i32) -> (i32, i32) {
    %c0_i32 = arith.constant 0 : i32
    %c0_i32_0 = arith.constant 0 : i32
    return %arg0, %c0_i32 : i32, i32
  }
}

</mosaic_0001>

<llo_original>
// kernel: tpu_custom_call.1
$region0: #{tpu_custom_call.1}
  #allocation0 [shape = 'u32[]', space=smem, size = 0x4, offset = 0x4, fixed_abs, tag = 'smem constant byte address 0x4 - core index']
  #allocation1 [shape = 'u32[144,128]{1,0:T(1,128)}', space=vmem, size = 0x12000, scoped, tag = 'internal scratch']
  %s0 = inlined_call_operand.vmem [shape: s32[16,8], index: 0, kind: input, shape index: {}]
  %s1 = inlined_call_operand.hbm [shape: f32[120,128], index: 1, kind: input, shape index: {}]
  %s2 = inlined_call_operand.hbm [shape: f32[16,128], index: 2, kind: output, shape index: {}]
  %s3 = sld [smem:[#allocation0]]
  $region45: #{tpu_custom_call.1} parent=0
    _
  %s5 = ssub.s32 1, %s3
  %s6 = scalar_select 0, %s5, %s3
  $region1: #{tpu_custom_call.1} parent=0
    #allocation2 [shape = 'u8[61440]{0}', space=vmem, size = 0xf000, scoped, tag = 'input window, operand 1, single buffered']
    #allocation3 [shape = 's32[2]{0}', space=sflag, size = 0x8, scoped, tag = 'scoped memory for tpu_custom_call.1']
    #allocation4 [shape = 's32[2]{0}', space=sflag, size = 0x8, scoped, tag = 'scoped memory for tpu_custom_call.1']
    #allocation5 [shape = 'u8[8192]{0}', space=vmem, size = 0x2000, scoped, tag = 'output window, operand 0']
    %7 = vsyncpa [#allocation3], 0
    %8 = vsyncpa [#allocation4], 0
    %s9 = scalar_lea.sflag [#allocation4], 1
    %10 = vsyncpa %s9, 0
    loop: start=0, step=1, limit=4
    $region2: #{tpu_custom_call.1} parent=1 // loop_pre_header
      _
    $region3: #{tpu_custom_call.1} parent=1 // loop_header
      %s12 = sphi 0, %s16
      %p13 = scmp.ge.s32.totalorder %s12, 4
      %s22 = sphi 0, %s24
      %s25 = sphi 0, %s22
      %s26 = sphi 0, %s25
      %s42 = sphi 0, %s26
      %s46 = sphi 0, %s46
      %s48 = sphi 0, %s46
      %s49 = sphi 0, %s48
      %s63 = sphi 0, %s49
      %s69 = sphi 0, %s71
      %s72 = sphi 0, %s69
      %s73 = sphi 0, %s72
      %s89 = sphi 0, %s73
    $region4: #{tpu_custom_call.1} parent=1 // loop_header_branch
      %15 = sbr.rel (%p13) target = $region8
    $region5: #{tpu_custom_call.1} parent=1 // loop_body
      %s17 = ssub.s32 %s12, 1
      %s18 = ssub.s32 %s12, 2
      %s19 = sadd.s32 %s12, 1
      %s20 = ssub.s32 %s12, %s19
      %p21 = scmp.eq.s32.totalorder %s20, 0
      %s23 = sadd.s32 %s22, 1
      %s24 = scalar_select %p21, %s22, %s23
      %p27 = pneg %p21
      %p28 = scmp.eq.s32.totalorder %s12, 1
      %p29 = por %p27, %p28
      %p30 = scmp.ne.s32.totalorder %s22, %s25
      %p31 = scmp.eq.s32.totalorder %s12, 0
      %p32 = por %p30, %p31
      %p33 = scmp.ne.s32.totalorder %s22, %s25
      %p34 = scmp.eq.s32.totalorder %s17, 1
      %p35 = por %p33, %p34
      %p36 = scmp.ne.s32.totalorder %s25, %s26
      %p37 = scmp.eq.s32.totalorder %s17, 0
      %p38 = por %p36, %p37
      %p39 = scmp.ne.s32.totalorder %s25, %s26
      %p40 = scmp.eq.s32.totalorder %s18, 1
      %p41 = por %p39, %p40
      %p43 = scmp.ne.s32.totalorder %s26, %s42
      %p44 = scmp.eq.s32.totalorder %s18, 0
      %p45 = por %p43, %p44
      %s47 = sadd.s32 %s46, 1
      %p50 = scmp.eq.s32.totalorder %s12, 1
      %p51 = scmp.ne.s32.totalorder %s46, %s48
      %p52 = scmp.eq.s32.totalorder %s12, 0
      %p53 = por %p51, %p52
      %p54 = scmp.ne.s32.totalorder %s46, %s48
      %p55 = scmp.eq.s32.totalorder %s17, 1
      %p56 = por %p54, %p55
      %p57 = scmp.ne.s32.totalorder %s48, %s49
      %p58 = scmp.eq.s32.totalorder %s17, 0
      %p59 = por %p57, %p58
      %p60 = scmp.ne.s32.totalorder %s48, %s49
      %p61 = scmp.eq.s32.totalorder %s18, 1
      %p62 = por %p60, %p61
      %p64 = scmp.ne.s32.totalorder %s49, %s63
      %p65 = scmp.eq.s32.totalorder %s18, 0
      %p66 = por %p64, %p65
      %s67 = ssub.s32 %s12, %s19
      %p68 = scmp.eq.s32.totalorder %s67, 0
      %s70 = sadd.s32 %s69, 1
      %s71 = scalar_select %p68, %s69, %s70
      %p74 = pneg %p68
      %p75 = scmp.eq.s32.totalorder %s12, 1
      %p76 = por %p74, %p75
      %p77 = scmp.ne.s32.totalorder %s69, %s72
      %p78 = scmp.eq.s32.totalorder %s12, 0
      %p79 = por %p77, %p78
      %p80 = scmp.ne.s32.totalorder %s69, %s72
      %p81 = scmp.eq.s32.totalorder %s17, 1
      %p82 = por %p80, %p81
      %p83 = scmp.ne.s32.totalorder %s72, %s73
      %p84 = scmp.eq.s32.totalorder %s17, 0
      %p85 = por %p83, %p84
      %p86 = scmp.ne.s32.totalorder %s72, %s73
      %p87 = scmp.eq.s32.totalorder %s18, 1
      %p88 = por %p86, %p87
      %p90 = scmp.ne.s32.totalorder %s73, %s89
      %p91 = scmp.eq.s32.totalorder %s18, 0
      %p92 = por %p90, %p91
      %p93 = scmp.le.s32.totalorder 1, %s12
      %p94 = scmp.lt.s32.totalorder %s12, 3
      %p95 = pnand %p93, %p94
      %p96 = pneg %p95
      // Predicated region
      $region9: #{tpu_custom_call.1} parent=5 // pred_check
        _
      $region10: #{tpu_custom_call.1} parent=5 // pred_check_branch
        %98 = sbr.rel (%p95) target = $region12
      $region11: #{tpu_custom_call.1} parent=5 // pred_region
        %s99 = ssub.s32 %s12, 1
        // Predicated region
        $region13: #{tpu_custom_call.1} parent=11 // pred_check
          %p100 = pneg %p59
        $region14: #{tpu_custom_call.1} parent=11 // pred_check_branch
          %102 = sbr.rel (%p100) target = $region16
        $region15: #{tpu_custom_call.1} parent=11 // pred_region
          %s104 = ssub.s32 1920, 1920
          %105 = vsyncadd [#allocation3], %s104
          %s106 = sshll.u32 [#allocation2], 4
          %s107 = int_to_ptr.vmem [resolvable:$true] %s106
          %112 = dma.hbm_to_vmem [thread:$0]  %s1, 1920, %s107, [#allocation3], 128, 128, 8
        $region16: #{tpu_custom_call.1} parent=11 // pred_fallthru
          _
      $region12: #{tpu_custom_call.1} parent=5 // pred_fallthru
        _
      %p113 = scmp.lt.s32.totalorder %s12, 2
      // Predicated region
      $region17: #{tpu_custom_call.1} parent=5 // pred_check
        %p114 = pneg %p113
      $region18: #{tpu_custom_call.1} parent=5 // pred_check_branch
        %116 = sbr.rel (%p114) target = $region20
      $region19: #{tpu_custom_call.1} parent=5 // pred_region
        // Predicated region
        $region21: #{tpu_custom_call.1} parent=19 // pred_check
          %p117 = pneg %p32
        $region22: #{tpu_custom_call.1} parent=19 // pred_check_branch
          %119 = sbr.rel (%p117) target = $region24
        $region23: #{tpu_custom_call.1} parent=19 // pred_region
          %p120 = scmp.lt.s32.totalorder %s12, 1
          %s121 = scalar_select %p120, %s12, 1
          %s122 = smul.addr %s121, 8
          %s123 = scalar_lea.vmem %s0, %s122
        $region24: #{tpu_custom_call.1} parent=19 // pred_fallthru
          _
      $region20: #{tpu_custom_call.1} parent=5 // pred_fallthru
        _
      %p124 = scmp.le.s32.totalorder 1, %s12
      %p125 = scmp.lt.s32.totalorder %s12, 3
      %p126 = pnand %p124, %p125
      %p127 = pneg %p126
      // Predicated region
      $region25: #{tpu_custom_call.1} parent=5 // pred_check
        _
      $region26: #{tpu_custom_call.1} parent=5 // pred_check_branch
        %129 = sbr.rel (%p126) target = $region28
      $region27: #{tpu_custom_call.1} parent=5 // pred_region
        %s130 = ssub.s32 %s12, 1
        // Predicated region
        $region29: #{tpu_custom_call.1} parent=27 // pred_check
          %p131 = pneg %p59
        $region30: #{tpu_custom_call.1} parent=27 // pred_check_branch
          %133 = sbr.rel (%p131) target = $region32
        $region31: #{tpu_custom_call.1} parent=27 // pred_region
          %134 = dma.done [#allocation3], 1920
        $region32: #{tpu_custom_call.1} parent=27 // pred_fallthru
          _
        %p135 = scmp.lt.s32.totalorder %s17, 1
        %s136 = scalar_select %p135, %s17, 1
        %s137 = smul.addr %s136, 8
        %s138 = scalar_lea.vmem %s0, %s137
        %p139 = pneg %p38
        %p140 = pneg %p35
        %p141 = pneg %p59
        %p142 = pneg %p56
        %p143 = pneg %p85
        %p144 = pneg %p82
        %s145 = sand.u32 %s72, 1
        %s146 = scalar_lea.sflag [#allocation4], %s145
        %s147 = sand.u32 %s72, 1
        %s148 = smul.addr %s147, 8
        %s149 = scalar_lea.vmem [#allocation5], %s148
        %p150 = scmp.lt.s32.totalorder %s17, 1
        %s151 = scalar_select %p150, %s17, 1
        %s152 = smul.addr %s151, 8
        %s153 = scalar_lea.vmem %s0, %s152
        %v154 = vld [vmem:[%s153] sm:$0xff]
        %v155 = vlaneseq
        %v156 = vand.u32 %v155, 127
        %157 = vset.pattern.permute.xlu0 0
        %158 = vperm.xlu0 %157, %v154
        %v159 = vpop.permute.xlu0 %158
        %vm160 = vcmp.eq.s32.totalorder %v159, %v156
        %v161 = vsel %vm160, 1, 0
        %162 = vset.pattern.permute.xlu0 1
        %163 = vperm.xlu0 %162, %v154
        %v164 = vpop.permute.xlu0 %163
        %vm165 = vcmp.eq.s32.totalorder %v164, %v156
        %v166 = vsel %vm165, 1, 0
        %v167 = vadd.s32 %v161, %v166
        %168 = vset.pattern.permute.xlu0 2
        %169 = vperm.xlu0 %168, %v154
        %v170 = vpop.permute.xlu0 %169
        %vm171 = vcmp.eq.s32.totalorder %v170, %v156
        %v172 = vsel %vm171, 1, 0
        %v173 = vadd.s32 %v167, %v172
        %174 = vset.pattern.permute.xlu0 3
        %175 = vperm.xlu0 %174, %v154
        %v176 = vpop.permute.xlu0 %175
        %vm177 = vcmp.eq.s32.totalorder %v176, %v156
        %v178 = vsel %vm177, 1, 0
        %v179 = vadd.s32 %v173, %v178
        %180 = vset.pattern.permute.xlu0 4
        %181 = vperm.xlu0 %180, %v154
        %v182 = vpop.permute.xlu0 %181
        %vm183 = vcmp.eq.s32.totalorder %v182, %v156
        %v184 = vsel %vm183, 1, 0
        %v185 = vadd.s32 %v179, %v184
        %186 = vset.pattern.permute.xlu0 5
        %187 = vperm.xlu0 %186, %v154
        %v188 = vpop.permute.xlu0 %187
        %vm189 = vcmp.eq.s32.totalorder %v188, %v156
        %v190 = vsel %vm189, 1, 0
        %v191 = vadd.s32 %v185, %v190
        %192 = vset.pattern.permute.xlu0 6
        %193 = vperm.xlu0 %192, %v154
        %v194 = vpop.permute.xlu0 %193
        %vm195 = vcmp.eq.s32.totalorder %v194, %v156
        %v196 = vsel %vm195, 1, 0
        %v197 = vadd.s32 %v191, %v196
        %198 = vset.pattern.permute.xlu0 7
        %199 = vperm.xlu0 %198, %v154
        %v200 = vpop.permute.xlu0 %199
        %vm201 = vcmp.eq.s32.totalorder %v200, %v156
        %v202 = vsel %vm201, 1, 0
        %v203 = vadd.s32 %v197, %v202
        %v204 = vcvt.s32.f32 %v203
        %v205 = vld [vmem:[#allocation2 + $0x70] sm:$0xff]
        %v206 = vld [vmem:[#allocation2] sm:$0xff]
        %v207 = vld [vmem:[#allocation2 + $0x8] sm:$0xff]
        %v208 = vld [vmem:[#allocation2 + $0x10] sm:$0xff]
        %v209 = vld [vmem:[#allocation2 + $0x18] sm:$0xff]
        %v210 = vld [vmem:[#allocation2 + $0x20] sm:$0xff]
        %v211 = vld [vmem:[#allocation2 + $0x28] sm:$0xff]
        %v212 = vld [vmem:[#allocation2 + $0x30] sm:$0xff]
        %v213 = vld [vmem:[#allocation2 + $0x38] sm:$0xff]
        %vm214 = vcmask 523264
        %v216 = vsel %vm214, %v204, 0
        %218 = vmatprep.subr.mxu0 0.0
        %219 = vmatpush1.msra.mxu0 0.0
        %220 = vmatprep.subr.mxu0 0.0
        %221 = vmatpush1.msra.mxu0 0.0
        %222 = vmatprep.subr.mxu0 0.0
        %223 = vmatpush1.msra.mxu0 0.0
        %224 = vmatprep.subr.mxu0 0.0
        %225 = vmatpush1.msra.mxu0 0.0
        %226 = vmatprep.subr.mxu0 0.0
        %227 = vmatpush1.msra.mxu0 0.0
        %228 = vmatprep.subr.mxu0 0.0
        %229 = vmatpush1.msra.mxu0 0.0
        %230 = vmatprep.subr.mxu0 0.0
        %231 = vmatpush1.msra.mxu0 0.0
        %232 = vmatprep.subr.mxu0 0.0
        %233 = vmatpush1.msra.mxu0 0.0
        %234 = vmatprep.subr.mxu0 0.0
        %235 = vmatpush1.msra.mxu0 %v213
        %236 = vmatprep.subr.mxu0 0.0
        %237 = vmatpush1.msra.mxu0 %v212
        %238 = vmatprep.subr.mxu0 0.0
        %239 = vmatpush1.msra.mxu0 %v211
        %240 = vmatprep.subr.mxu0 0.0
        %241 = vmatpush1.msra.mxu0 %v210
        %242 = vmatprep.subr.mxu0 0.0
        %243 = vmatpush1.msra.mxu0 %v209
        %244 = vmatprep.subr.mxu0 0.0
        %245 = vmatpush1.msra.mxu0 %v208
        %246 = vmatprep.subr.mxu0 0.0
        %247 = vmatpush1.msra.mxu0 %v207
        %248 = vmatprep.subr.mxu0 0.0
        %249 = vmatpush1.msra.mxu0 %v206
        %250 = vmatprep.subr.mxu0 0.0
        %251 = vmatpush2.msra.mxu0 0.0
        %252 = vmatprep.subr.mxu0 0.0
        %253 = vmatpush2.msra.mxu0 0.0
        %254 = vmatprep.subr.mxu0 0.0
        %255 = vmatpush2.msra.mxu0 0.0
        %256 = vmatprep.subr.mxu0 0.0
        %257 = vmatpush2.msra.mxu0 0.0
        %258 = vmatprep.subr.mxu0 0.0
        %259 = vmatpush2.msra.mxu0 0.0
        %260 = vmatprep.subr.mxu0 0.0
        %261 = vmatpush2.msra.mxu0 0.0
        %262 = vmatprep.subr.mxu0 0.0
        %263 = vmatpush2.msra.mxu0 0.0
        %264 = vmatprep.subr.mxu0 0.0
        %265 = vmatpush2.msra.mxu0 0.0
        %266 = vmatprep.subr.mxu0 0.0
        %267 = vmatpush2.msra.mxu0 0.0
        %268 = vmatprep.subr.mxu0 0.0
        %269 = vmatpush2.msra.mxu0 0.0
        %270 = vmatprep.subr.mxu0 0.0
        %271 = vmatpush2.msra.mxu0 0.0
        %272 = vmatprep.subr.mxu0 0.0
        %273 = vmatpush2.msra.mxu0 0.0
        %274 = vmatprep.subr.mxu0 0.0
        %275 = vmatpush2.msra.mxu0 0.0
        %276 = vmatprep.subr.mxu0 0.0
        %277 = vmatpush2.msra.mxu0 0.0
        %278 = vmatprep.subr.mxu0 0.0
        %279 = vmatpush2.msra.mxu0 0.0
        %280 = vmatprep.subr.mxu0 0.0
        %281 = vmatpush2.msra.mxu0 0.0
        %282 = vmatprep.mubr.f32.mxu0 0.0
        %283 = vmatmul.mubr.f32.gmra.mxu0 %v216
        %v284 = vpop.f32.mrf.mxu0
        %v285 = vadd.f32 0.0, %v284
        %v286 = vpop.f32.mrf.mxu0
        %287 = vdwg.mxu0
        %v288 = vmul.f32 %v285, 0.125
        %v289 = vlaneseq
        %v290 = vshrl.u32 %v289, 7
        %v291 = vsub.s32 0, %v290
        %v292 = vrot.slane %v205, %v291
        %v293 = vadd.f32 %v288, %v292
        %v294 = vmax.f32 %v293, 0.0
        %v295 = vld [vmem:[#allocation2 + $0x40] sm:$0xff]
        %v296 = vld [vmem:[#allocation2 + $0x48] sm:$0xff]
        %v297 = vlaneseq
        %v298 = vshrl.u32 %v297, 7
        %v299 = vsub.s32 1, %v298
        %v300 = vrot.slane %v205, %v299
        %vm301 = vcmask 130048
        %v303 = vsel %vm301, %v294, 0
        %305 = vmatprep.subr.mxu0 0.0
        %306 = vmatpush1.msra.mxu0 0.0
        %307 = vmatprep.subr.mxu0 0.0
        %308 = vmatpush1.msra.mxu0 0.0
        %309 = vmatprep.subr.mxu0 0.0
        %310 = vmatpush1.msra.mxu0 0.0
        %311 = vmatprep.subr.mxu0 0.0
        %312 = vmatpush1.msra.mxu0 0.0
        %313 = vmatprep.subr.mxu0 0.0
        %314 = vmatpush1.msra.mxu0 0.0
        %315 = vmatprep.subr.mxu0 0.0
        %316 = vmatpush1.msra.mxu0 0.0
        %317 = vmatprep.subr.mxu0 0.0
        %318 = vmatpush1.msra.mxu0 0.0
        %319 = vmatprep.subr.mxu0 0.0
        %320 = vmatpush1.msra.mxu0 0.0
        %321 = vmatprep.subr.mxu0 0.0
        %322 = vmatpush1.msra.mxu0 0.0
        %323 = vmatprep.subr.mxu0 0.0
        %324 = vmatpush1.msra.mxu0 0.0
        %325 = vmatprep.subr.mxu0 0.0
        %326 = vmatpush1.msra.mxu0 0.0
        %327 = vmatprep.subr.mxu0 0.0
        %328 = vmatpush1.msra.mxu0 0.0
        %329 = vmatprep.subr.mxu0 0.0
        %330 = vmatpush1.msra.mxu0 0.0
        %331 = vmatprep.subr.mxu0 0.0
        %332 = vmatpush1.msra.mxu0 0.0
        %333 = vmatprep.subr.mxu0 0.0
        %334 = vmatpush1.msra.mxu0 %v296
        %335 = vmatprep.subr.mxu0 0.0
        %336 = vmatpush1.msra.mxu0 %v295
        %337 = vmatprep.subr.mxu0 0.0
        %338 = vmatpush2.msra.mxu0 0.0
        %339 = vmatprep.subr.mxu0 0.0
        %340 = vmatpush2.msra.mxu0 0.0
        %341 = vmatprep.subr.mxu0 0.0
        %342 = vmatpush2.msra.mxu0 0.0
        %343 = vmatprep.subr.mxu0 0.0
        %344 = vmatpush2.msra.mxu0 0.0
        %345 = vmatprep.subr.mxu0 0.0
        %346 = vmatpush2.msra.mxu0 0.0
        %347 = vmatprep.subr.mxu0 0.0
        %348 = vmatpush2.msra.mxu0 0.0
        %349 = vmatprep.subr.mxu0 0.0
        %350 = vmatpush2.msra.mxu0 0.0
        %351 = vmatprep.subr.mxu0 0.0
        %352 = vmatpush2.msra.mxu0 0.0
        %353 = vmatprep.subr.mxu0 0.0
        %354 = vmatpush2.msra.mxu0 0.0
        %355 = vmatprep.subr.mxu0 0.0
        %356 = vmatpush2.msra.mxu0 0.0
        %357 = vmatprep.subr.mxu0 0.0
        %358 = vmatpush2.msra.mxu0 0.0
        %359 = vmatprep.subr.mxu0 0.0
        %360 = vmatpush2.msra.mxu0 0.0
        %361 = vmatprep.subr.mxu0 0.0
        %362 = vmatpush2.msra.mxu0 0.0
        %363 = vmatprep.subr.mxu0 0.0
        %364 = vmatpush2.msra.mxu0 0.0
        %365 = vmatprep.subr.mxu0 0.0
        %366 = vmatpush2.msra.mxu0 0.0
        %367 = vmatprep.subr.mxu0 0.0
        %368 = vmatpush2.msra.mxu0 0.0
        %369 = vmatprep.mubr.f32.mxu0 0.0
        %370 = vmatmul.mubr.f32.gmra.mxu0 %v303
        %v371 = vpop.f32.mrf.mxu0
        %v372 = vadd.f32 %v300, %v371
        %v373 = vpop.f32.mrf.mxu0
        %374 = vdwg.mxu0
        %v375 = vmax.f32 %v372, 0.0
        %v376 = vld [vmem:[#allocation2 + $0x50] sm:$0xff]
        %v377 = vld [vmem:[#allocation2 + $0x58] sm:$0xff]
        %v378 = vld [vmem:[#allocation2 + $0x60] sm:$0xff]
        %v379 = vld [vmem:[#allocation2 + $0x68] sm:$0xff]
        %v380 = vlaneseq
        %v381 = vshrl.u32 %v380, 7
        %v382 = vsub.s32 2, %v381
        %v383 = vrot.slane %v205, %v382
        %vm384 = vcmask 261120
        %v386 = vsel %vm384, %v375, 0
        %388 = vmatprep.subr.mxu0 0.0
        %389 = vmatpush1.msra.mxu0 0.0
        %390 = vmatprep.subr.mxu0 0.0
        %391 = vmatpush1.msra.mxu0 0.0
        %392 = vmatprep.subr.mxu0 0.0
        %393 = vmatpush1.msra.mxu0 0.0
        %394 = vmatprep.subr.mxu0 0.0
        %395 = vmatpush1.msra.mxu0 0.0
        %396 = vmatprep.subr.mxu0 0.0
        %397 = vmatpush1.msra.mxu0 0.0
        %398 = vmatprep.subr.mxu0 0.0
        %399 = vmatpush1.msra.mxu0 0.0
        %400 = vmatprep.subr.mxu0 0.0
        %401 = vmatpush1.msra.mxu0 0.0
        %402 = vmatprep.subr.mxu0 0.0
        %403 = vmatpush1.msra.mxu0 0.0
        %404 = vmatprep.subr.mxu0 0.0
        %405 = vmatpush1.msra.mxu0 0.0
        %406 = vmatprep.subr.mxu0 0.0
        %407 = vmatpush1.msra.mxu0 0.0
        %408 = vmatprep.subr.mxu0 0.0
        %409 = vmatpush1.msra.mxu0 0.0
        %410 = vmatprep.subr.mxu0 0.0
        %411 = vmatpush1.msra.mxu0 0.0
        %412 = vmatprep.subr.mxu0 0.0
        %413 = vmatpush1.msra.mxu0 %v379
        %414 = vmatprep.subr.mxu0 0.0
        %415 = vmatpush1.msra.mxu0 %v378
        %416 = vmatprep.subr.mxu0 0.0
        %417 = vmatpush1.msra.mxu0 %v377
        %418 = vmatprep.subr.mxu0 0.0
        %419 = vmatpush1.msra.mxu0 %v376
        %420 = vmatprep.subr.mxu0 0.0
        %421 = vmatpush2.msra.mxu0 0.0
        %422 = vmatprep.subr.mxu0 0.0
        %423 = vmatpush2.msra.mxu0 0.0
        %424 = vmatprep.subr.mxu0 0.0
        %425 = vmatpush2.msra.mxu0 0.0
        %426 = vmatprep.subr.mxu0 0.0
        %427 = vmatpush2.msra.mxu0 0.0
        %428 = vmatprep.subr.mxu0 0.0
        %429 = vmatpush2.msra.mxu0 0.0
        %430 = vmatprep.subr.mxu0 0.0
        %431 = vmatpush2.msra.mxu0 0.0
        %432 = vmatprep.subr.mxu0 0.0
        %433 = vmatpush2.msra.mxu0 0.0
        %434 = vmatprep.subr.mxu0 0.0
        %435 = vmatpush2.msra.mxu0 0.0
        %436 = vmatprep.subr.mxu0 0.0
        %437 = vmatpush2.msra.mxu0 0.0
        %438 = vmatprep.subr.mxu0 0.0
        %439 = vmatpush2.msra.mxu0 0.0
        %440 = vmatprep.subr.mxu0 0.0
        %441 = vmatpush2.msra.mxu0 0.0
        %442 = vmatprep.subr.mxu0 0.0
        %443 = vmatpush2.msra.mxu0 0.0
        %444 = vmatprep.subr.mxu0 0.0
        %445 = vmatpush2.msra.mxu0 0.0
        %446 = vmatprep.subr.mxu0 0.0
        %447 = vmatpush2.msra.mxu0 0.0
        %448 = vmatprep.subr.mxu0 0.0
        %449 = vmatpush2.msra.mxu0 0.0
        %450 = vmatprep.subr.mxu0 0.0
        %451 = vmatpush2.msra.mxu0 0.0
        %452 = vmatprep.mubr.f32.mxu0 0.0
        %453 = vmatmul.mubr.f32.gmra.mxu0 %v386
        %v454 = vpop.f32.mrf.mxu0
        %v455 = vadd.f32 %v383, %v454
        %v456 = vpop.f32.mrf.mxu0
        %457 = vdwg.mxu0
        %458 = vst [vmem:[%s149] sm:$0xff] %v455
        %s459 = sand.u32 %s72, 1
        %s460 = scalar_lea.sflag [#allocation4], %s459
        %s461 = sand.u32 %s72, 1
        %s462 = smul.addr %s461, 8
        %s463 = scalar_lea.vmem [#allocation5], %s462
        // Predicated region
        $region33: #{tpu_custom_call.1} parent=27 // pred_check
          %p464 = pneg %p82
        $region34: #{tpu_custom_call.1} parent=27 // pred_check_branch
          %466 = sbr.rel (%p464) target = $region36
        $region35: #{tpu_custom_call.1} parent=27 // pred_region
          %s468 = ssub.s32 128, 128
          %469 = vsyncadd %s460, %s468
          %s470 = smul.addr %s17, 128
          %s471 = scalar_lea.hbm %s2, %s470
          %s473 = sshll.u32 %s463, 4
          %s474 = int_to_ptr.vmem [resolvable:$true] %s473
          %476 = dma.vmem_to_hbm [thread:$0]  %s474, 128, %s471, %s460
        $region36: #{tpu_custom_call.1} parent=27 // pred_fallthru
          _
      $region28: #{tpu_custom_call.1} parent=5 // pred_fallthru
        _
      %p477 = scmp.le.s32.totalorder 2, %s12
      // Predicated region
      $region37: #{tpu_custom_call.1} parent=5 // pred_check
        %p478 = pneg %p477
      $region38: #{tpu_custom_call.1} parent=5 // pred_check_branch
        %480 = sbr.rel (%p478) target = $region40
      $region39: #{tpu_custom_call.1} parent=5 // pred_region
        %s481 = ssub.s32 %s12, 2
        // Predicated region
        $region41: #{tpu_custom_call.1} parent=39 // pred_check
          %p482 = pneg %p88
        $region42: #{tpu_custom_call.1} parent=39 // pred_check_branch
          %484 = sbr.rel (%p482) target = $region44
        $region43: #{tpu_custom_call.1} parent=39 // pred_region
          %s485 = sand.u32 %s73, 1
          %s486 = scalar_lea.sflag [#allocation4], %s485
          %s487 = sand.u32 %s73, 1
          %s488 = smul.addr %s487, 8
          %s489 = scalar_lea.vmem [#allocation5], %s488
          %490 = dma.done %s486, 128
        $region44: #{tpu_custom_call.1} parent=39 // pred_fallthru
          _
      $region40: #{tpu_custom_call.1} parent=5 // pred_fallthru
        _
    $region6: #{tpu_custom_call.1} parent=1 // loop_footer
      %s16 = sadd.s32 1, %s12
    $region7: #{tpu_custom_call.1} parent=1 // loop_footer_branch
      %11 = sbr.rel target = $region3
    $region8: #{tpu_custom_call.1} parent=1 // loop_exit
      _
    %491 = vsyncpa [#allocation3], 1
    %s492 = scalar_lea.sflag [#allocation3], 1
    %493 = vsyncpa %s492, 1
    %494 = vsyncpa [#allocation4], 1
    %s495 = scalar_lea.sflag [#allocation4], 1
    %496 = vsyncpa %s495, 1

</llo_original>
